<compile_context>
chip_gen: v7x
topology: tpu7x:2x2x1
jax: 0.10.0
libtpu: 0.0.40
codegen_flags: <defaults>
</compile_context>

<pallas_src>
import jax
import jax.numpy as jnp
from jax.experimental import pallas as pl
from jax.experimental.pallas import tpu as pltpu

LANE = 128
SUB = 8
DEFAULT_BLOCK_ROWS = 2048   # 2048*128*4B = 1 MiB per input block; 3 inputs x 2 bufs ~= 6 MiB VMEM


def _bce_elementwise(x, t):
    # Mathematically identical to the PyTorch module's
    #   max(-x,0) + x - x*t + log(exp(-max(-x,0)) + exp(-x-max(-x,0)))
    # but with 1 exp + 1 log1p instead of 2 exp + 1 log.
    x = x.astype(jnp.float32)
    t = t.astype(jnp.float32)
    return jnp.maximum(x, 0.0) - x * t + jnp.log1p(jnp.exp(-jnp.abs(x)))


def _make_kernel(rows, block_rows, steps_per_split, mask_threshold, weighted):
    """Build the grid kernel. All shape parameters are static Python ints.

    mask_threshold: blocks with linear index >= mask_threshold need row masking
    (partial last block and/or clamped-overhang blocks from the core split).
    """

    def kernel(*refs):
        if weighted:
            ab_ref, x_ref, t_ref, w_ref, out_ref = refs
        else:
            x_ref, t_ref, out_ref = refs

        c = pl.program_id(0)          # core-split ("parallel") axis
        s = pl.program_id(1)          # reduction ("arbitrary") axis

        @pl.when(s == 0)
        def _():
            out_ref[...] = jnp.zeros_like(out_ref)

        loss = _bce_elementwise(x_ref[...], t_ref[...])
        if weighted:
            # alpha*loss + beta*loss*w == loss * (alpha + beta*w)
            loss = loss * (ab_ref[0] + ab_ref[1] * w_ref[...].astype(jnp.float32))

        blk = c * steps_per_split + s

        # Fast path: fully in-bounds interior block -> no iota/compare/select needed.
        @pl.when(blk < mask_threshold)
        def _():
            # Lane-parallel partial sums: (block_rows,128) -> (bl/8, 8,128) -> (8,128).
            out_ref[...] += loss.reshape(-1, SUB, LANE).sum(axis=0)

        # Slow path: zero rows past the end of the real array (partial last block and
        # the overhanging, index-clamped blocks created by the core split). select()
        # semantics, so garbage (even NaN/Inf) in the OOB region never reaches the sum.
        @pl.when(blk >= mask_threshold)
        def _():
            row0 = blk * block_rows
            row_idx = row0 + jax.lax.broadcasted_iota(jnp.int32, loss.shape, 0)
            masked = jnp.where(row_idx < rows, loss, 0.0)
            out_ref[...] += masked.reshape(-1, SUB, LANE).sum(axis=0)

    return kernel


def weighted_bce_with_logits_loss(inp, target, weight=None, alpha=1.0, beta=1.0,
                                  size_average=True, block_rows=DEFAULT_BLOCK_ROWS):
    if target.shape != inp.shape:
        raise ValueError(
            "Target size ({}) must be the same as input size ({})".format(
                target.shape, inp.shape))

    weighted = weight is not None
    n = int(inp.size)
    x_flat = inp.reshape(-1)
    t_flat = target.reshape(-1)
    w_flat = (jnp.broadcast_to(weight, inp.shape).reshape(-1) if weighted else None)

    rows = n // LANE          # full lane-dense rows handled by the kernel
    n_main = rows * LANE
    tail = n - n_main         # <128 leftover elements handled in plain JAX (no padding)

    total = jnp.float32(0.0)

    if rows > 0:
        br = max(SUB, min(int(block_rows), -(-rows // SUB) * SUB))
        br = -(-br // SUB) * SUB                      # multiple of 8 sublanes
        num_blocks = -(-rows // br)
        n_splits = 2 if num_blocks >= 2 else 1        # shards across the 2 TCs on v7x
        steps = -(-num_blocks // n_splits)

        # Blocks with index >= mask_threshold need in-kernel row masking.
        last_block_partial = (rows % br) != 0
        mask_threshold = num_blocks - 1 if last_block_partial else num_blocks

        def to2d(v):
            # When n % 128 == 0 this is a pure (free) reshape; otherwise slice off the tail.
            v = v[:n_main] if tail else v
            return v.reshape(rows, LANE)

        def in_map(c, s):
            # Clamp overhanging block indices; their rows are zeroed in-kernel.
            return (jnp.minimum(c * steps + s, num_blocks - 1), 0)

        tile = pl.BlockSpec((br, LANE), in_map)
        out_spec = pl.BlockSpec((SUB, LANE), lambda c, s: (c, 0))

        kernel = _make_kernel(rows, br, steps, mask_threshold, weighted)

        if weighted:
            ab = jnp.array([alpha, beta], dtype=jnp.float32)
            in_specs = [pl.BlockSpec(memory_space=pltpu.SMEM), tile, tile, tile]
            args = (ab, to2d(x_flat), to2d(t_flat), to2d(w_flat))
        else:
            in_specs = [tile, tile]
            args = (to2d(x_flat), to2d(t_flat))

        partials = pl.pallas_call(
            kernel,
            out_shape=jax.ShapeDtypeStruct((n_splits * SUB, LANE), jnp.float32),
            grid=(n_splits, steps),
            in_specs=in_specs,
            out_specs=out_spec,
            compiler_params=pltpu.CompilerParams(
                dimension_semantics=("parallel", "arbitrary"),
                vmem_limit_bytes=32 * 1024 * 1024),
        )(*args)
        total = total + jnp.sum(partials, dtype=jnp.float32)

    if tail:
        # TODO(synk): sub-128-lane remainder is reduced in plain JAX (no clean lane-dense tile).
        xt = x_flat[n_main:]
        tt = t_flat[n_main:]
        l = _bce_elementwise(xt, tt)
        if weighted:
            l = l * (jnp.float32(alpha) + jnp.float32(beta) * w_flat[n_main:].astype(jnp.float32))
        total = total + jnp.sum(l, dtype=jnp.float32)

    if size_average:
        total = total / jnp.float32(n)
    return total


def _reference(inp, target, weight, alpha, beta, size_average=True):
    x = inp.astype(jnp.float32)
    t = target.astype(jnp.float32)
    max_val = jnp.maximum(-x, 0.0)
    loss = x - x * t + max_val + jnp.log(jnp.exp(-max_val) + jnp.exp(-x - max_val))
    if weight is not None:
        loss = alpha * loss + beta * loss * weight
    return loss.mean() if size_average else loss.sum()


if __name__ == "__main__":
    key = jax.random.PRNGKey(0)
    k1, k2, k3 = jax.random.split(key, 3)

    def check(shape, use_weight, size_average, block_rows=DEFAULT_BLOCK_ROWS):
        logits = jax.random.normal(k1, shape, jnp.float32)
        targets = (jax.random.uniform(k2, shape) > 0.5).astype(jnp.float32)
        weights = jax.random.uniform(k3, shape, jnp.float32) if use_weight else None
        alpha, beta = 0.7, 0.3
        got = jax.block_until_ready(
            weighted_bce_with_logits_loss(logits, targets, weights, alpha, beta,
                                          size_average=size_average,
                                          block_rows=block_rows))
        ref = _reference(logits, targets, weights, alpha, beta, size_average)
        g, r = float(got), float(ref)
        assert abs(g - r) <= 1e-5 * max(1.0, abs(r)), (shape, use_weight, size_average, g, r)

    check((2, 4, 16, 16), True, True)                 # weighted, mean
    check((2, 4, 16, 16), False, True)                # weight=None path (2-input kernel)
    check((2, 4, 16, 16), True, False)                # sum reduction
    check((2, 3, 16, 32), True, True, block_rows=8)   # multi-block: 2-way split + clamped overhang
    check((2, 3, 7, 11), True, True)                  # n % 128 != 0: partial block mask + JAX tail
    print("KERNEL_OK")
</pallas_src>

<mosaic_0001>
module attributes {stable_mosaic.version = 11 : i64} {
  func.func @kernel(%arg0: i32, %arg1: i32, %arg2: memref<2xf32, #tpu.memory_space<smem>>, %arg3: memref<16x128xf32, #tpu.memory_space<vmem>>, %arg4: memref<16x128xf32, #tpu.memory_space<vmem>>, %arg5: memref<16x128xf32, #tpu.memory_space<vmem>>, %arg6: memref<8x128xf32, #tpu.memory_space<vmem>>) attributes {dimension_semantics = [#tpu.dimension_semantics<parallel>, #tpu.dimension_semantics<arbitrary>], iteration_bounds = array<i64: 1, 1>, scalar_prefetch = 0 : i64, scratch_operands = 0 : i64, tpu.core_type = #tpu.core_type<tc>, window_params = [{transform_indices = @transform_0, window_bounds = array<i64: 2>}, {transform_indices = @transform_1, window_bounds = array<i64: 16, 128>}, {transform_indices = @transform_2, window_bounds = array<i64: 16, 128>}, {transform_indices = @transform_3, window_bounds = array<i64: 16, 128>}, {transform_indices = @transform_4, window_bounds = array<i64: 8, 128>}]} {
    %c0_i32 = arith.constant 0 : i32
    %0 = arith.cmpi eq, %arg1, %c0_i32 : i32
    %1 = arith.extui %0 : i1 to i32
    %c0_i32_0 = arith.constant 0 : i32
    %2 = arith.cmpi ne, %1, %c0_i32_0 : i32
    scf.if %2 {
      %cst_12 = arith.constant 0.000000e+00 : f32
      %31 = vector.broadcast %cst_12 : f32 to vector<8x128xf32>
      %c0_13 = arith.constant 0 : index
      %c0_14 = arith.constant 0 : index
      %32 = vector.load %arg6[%c0_13, %c0_14] : memref<8x128xf32, #tpu.memory_space<vmem>>, vector<8x128xf32>
      tpu.vector_store %arg6[%c0_13, %c0_14], %31 {strides = array<i32>} : memref<8x128xf32, #tpu.memory_space<vmem>>, vector<8x128xf32>,
    } else {
    }
    %c0 = arith.constant 0 : index
    %c0_1 = arith.constant 0 : index
    %3 = vector.load %arg3[%c0, %c0_1] : memref<16x128xf32, #tpu.memory_space<vmem>>, vector<16x128xf32>
    %c0_2 = arith.constant 0 : index
    %c0_3 = arith.constant 0 : index
    %4 = vector.load %arg4[%c0_2, %c0_3] : memref<16x128xf32, #tpu.memory_space<vmem>>, vector<16x128xf32>
    %cst = arith.constant 0.000000e+00 : f32
    %5 = vector.broadcast %cst : f32 to vector<16x128xf32>
    %6 = arith.maximumf %3, %5 : vector<16x128xf32>
    %7 = arith.mulf %3, %4 : vector<16x128xf32>
    %8 = arith.subf %6, %7 : vector<16x128xf32>
    %9 = math.absf %3 : vector<16x128xf32>
    %cst_4 = arith.constant 0.000000e+00 : f32
    %10 = vector.broadcast %cst_4 : f32 to vector<16x128xf32>
    %11 = arith.subf %10, %9 : vector<16x128xf32>
    %12 = math.exp %11 : vector<16x128xf32>
    %13 = math.log1p %12 : vector<16x128xf32>
    %14 = arith.addf %8, %13 : vector<16x128xf32>
    %c0_5 = arith.constant 0 : index
    %15 = memref.load %arg2[%c0_5] : memref<2xf32, #tpu.memory_space<smem>>
    %c1 = arith.constant 1 : index
    %16 = memref.load %arg2[%c1] : memref<2xf32, #tpu.memory_space<smem>>
    %c0_6 = arith.constant 0 : index
    %c0_7 = arith.constant 0 : index
    %17 = vector.load %arg5[%c0_6, %c0_7] : memref<16x128xf32, #tpu.memory_space<vmem>>, vector<16x128xf32>
    %18 = vector.broadcast %16 : f32 to vector<16x128xf32>
    %19 = arith.mulf %18, %17 : vector<16x128xf32>
    %20 = vector.broadcast %15 : f32 to vector<16x128xf32>
    %21 = arith.addf %20, %19 : vector<16x128xf32>
    %22 = arith.mulf %14, %21 : vector<16x128xf32>
    %c1_i32 = arith.constant 1 : i32
    %23 = arith.muli %arg0, %c1_i32 : i32
    %24 = arith.addi %23, %arg1 : i32
    %c1_i32_8 = arith.constant 1 : i32
    %25 = arith.cmpi slt, %24, %c1_i32_8 : i32
    %26 = arith.extui %25 : i1 to i32
    %c0_i32_9 = arith.constant 0 : i32
    %27 = arith.cmpi ne, %26, %c0_i32_9 : i32
    scf.if %27 {
      %c0_12 = arith.constant 0 : index
      %c0_13 = arith.constant 0 : index
      %31 = vector.load %arg6[%c0_12, %c0_13] : memref<8x128xf32, #tpu.memory_space<vmem>>, vector<8x128xf32>
      %32 = vector.shape_cast %22 : vector<16x128xf32> to vector<2x8x128xf32>
      %cst_14 = arith.constant dense<0.000000e+00> : vector<8x128xf32>
      %33 = vector.multi_reduction <add>, %32, %cst_14 [0] : vector<2x8x128xf32> to vector<8x128xf32>
      %34 = arith.addf %31, %33 : vector<8x128xf32>
      %c0_15 = arith.constant 0 : index
      %c0_16 = arith.constant 0 : index
      %35 = vector.load %arg6[%c0_15, %c0_16] : memref<8x128xf32, #tpu.memory_space<vmem>>, vector<8x128xf32>
      tpu.vector_store %arg6[%c0_15, %c0_16], %34 {strides = array<i32>} : memref<8x128xf32, #tpu.memory_space<vmem>>, vector<8x128xf32>,
    } else {
    }
    %c1_i32_10 = arith.constant 1 : i32
    %28 = arith.cmpi sge, %24, %c1_i32_10 : i32
    %29 = arith.extui %28 : i1 to i32
    %c0_i32_11 = arith.constant 0 : i32
    %30 = arith.cmpi ne, %29, %c0_i32_11 : i32
    scf.if %30 {
      %c16_i32 = arith.constant 16 : i32
      %31 = arith.muli %24, %c16_i32 : i32
      %32 = tpu.iota {dimensions = array<i32: 0>} : vector<16x128xi32>
      %33 = vector.broadcast %31 : i32 to vector<16x128xi32>
      %34 = arith.addi %33, %32 : vector<16x128xi32>
      %c16_i32_12 = arith.constant 16 : i32
      %35 = vector.broadcast %c16_i32_12 : i32 to vector<16x128xi32>
      %36 = arith.cmpi slt, %34, %35 : vector<16x128xi32>
      %cst_13 = arith.constant 0.000000e+00 : f32
      %37 = vector.broadcast %cst_13 : f32 to vector<16x128xf32>
      %38 = arith.select %36, %22, %37 : vector<16x128xi1>, vector<16x128xf32>
      %c0_14 = arith.constant 0 : index
      %c0_15 = arith.constant 0 : index
      %39 = vector.load %arg6[%c0_14, %c0_15] : memref<8x128xf32, #tpu.memory_space<vmem>>, vector<8x128xf32>
      %40 = vector.shape_cast %38 : vector<16x128xf32> to vector<2x8x128xf32>
      %cst_16 = arith.constant dense<0.000000e+00> : vector<8x128xf32>
      %41 = vector.multi_reduction <add>, %40, %cst_16 [0] : vector<2x8x128xf32> to vector<8x128xf32>
      %42 = arith.addf %39, %41 : vector<8x128xf32>
      %c0_17 = arith.constant 0 : index
      %c0_18 = arith.constant 0 : index
      %43 = vector.load %arg6[%c0_17, %c0_18] : memref<8x128xf32, #tpu.memory_space<vmem>>, vector<8x128xf32>
      tpu.vector_store %arg6[%c0_17, %c0_18], %42 {strides = array<i32>} : memref<8x128xf32, #tpu.memory_space<vmem>>, vector<8x128xf32>,
    } else {
    }
    return
  }
  func.func @transform_0(%arg0: i32, %arg1: i32) -> i32 {
    %c0_i32 = arith.constant 0 : i32
    %c0_i32_0 = arith.constant 0 : i32
    return %c0_i32 : i32
  }
  func.func @transform_1(%arg0: i32, %arg1: i32) -> (i32, i32) {
    %c1_i32 = arith.constant 1 : i32
    %0 = arith.muli %arg0, %c1_i32 : i32
    %1 = arith.addi %0, %arg1 : i32
    %c0_i32 = arith.constant 0 : i32
    %2 = arith.minsi %1, %c0_i32 : i32
    %c0_i32_0 = arith.constant 0 : i32
    %c0_i32_1 = arith.constant 0 : i32
    return %2, %c0_i32_0 : i32, i32
  }
  func.func @transform_2(%arg0: i32, %arg1: i32) -> (i32, i32) {
    %c1_i32 = arith.constant 1 : i32
    %0 = arith.muli %arg0, %c1_i32 : i32
    %1 = arith.addi %0, %arg1 : i32
    %c0_i32 = arith.constant 0 : i32
    %2 = arith.minsi %1, %c0_i32 : i32
    %c0_i32_0 = arith.constant 0 : i32
    %c0_i32_1 = arith.constant 0 : i32
    return %2, %c0_i32_0 : i32, i32
  }
  func.func @transform_3(%arg0: i32, %arg1: i32) -> (i32, i32) {
    %c1_i32 = arith.constant 1 : i32
    %0 = arith.muli %arg0, %c1_i32 : i32
    %1 = arith.addi %0, %arg1 : i32
    %c0_i32 = arith.constant 0 : i32
    %2 = arith.minsi %1, %c0_i32 : i32
    %c0_i32_0 = arith.constant 0 : i32
    %c0_i32_1 = arith.constant 0 : i32
    return %2, %c0_i32_0 : i32, i32
  }
  func.func @transform_4(%arg0: i32, %arg1: i32) -> (i32, i32) {
    %c0_i32 = arith.constant 0 : i32
    %c0_i32_0 = arith.constant 0 : i32
    return %arg0, %c0_i32 : i32, i32
  }
}

</mosaic_0001>

<llo_original>
// kernel: tpu_custom_call.1
$region0: #{tpu_custom_call.1}
  #allocation0 [shape = 'u32[]', space=smem, size = 0x4, offset = 0x4, fixed_abs, tag = 'smem constant byte address 0x4 - core index']
  #allocation1 [shape = 'u32[144,128]{1,0:T(1,128)}', space=vmem, size = 0x12000, scoped, tag = 'internal scratch']
  %s0 = inlined_call_operand.hbm [shape: f32[2], index: 0, kind: input, shape index: {}]
  %s1 = inlined_call_operand.hbm [shape: f32[16,128], index: 1, kind: input, shape index: {}]
  %s2 = inlined_call_operand.hbm [shape: f32[16,128], index: 2, kind: input, shape index: {}]
  %s3 = inlined_call_operand.hbm [shape: f32[16,128], index: 3, kind: input, shape index: {}]
  %s4 = inlined_call_operand.hbm [shape: f32[8,128], index: 4, kind: output, shape index: {}]
  %s5 = sld [smem:[#allocation0]]
  $region54: #{tpu_custom_call.1} parent=0
    _
  %s7 = ssub.s32 1, %s5
  %s8 = scalar_select 0, %s7, %s5
  $region1: #{tpu_custom_call.1} parent=0
    #allocation2 [shape = 'u8[512]{0}', space=smem, size = 0x200, scoped, tag = 'input window, operand 0, single buffered']
    #allocation3 [shape = 's32[1]{0}', space=sflag, size = 0x4, scoped, tag = 'scoped memory for tpu_custom_call.1']
    #allocation4 [shape = 's32[1]{0}', space=sflag, size = 0x4, scoped, tag = 'scoped memory for tpu_custom_call.1']
    #allocation5 [shape = 's32[1]{0}', space=sflag, size = 0x4, scoped, tag = 'scoped memory for tpu_custom_call.1']
    #allocation6 [shape = 'u8[8192]{0}', space=vmem, size = 0x2000, scoped, tag = 'input window, operand 1, single buffered']
    #allocation7 [shape = 'u8[8192]{0}', space=vmem, size = 0x2000, scoped, tag = 'input window, operand 2, single buffered']
    #allocation8 [shape = 's32[1]{0}', space=sflag, size = 0x4, scoped, tag = 'scoped memory for tpu_custom_call.1']
    #allocation9 [shape = 'u8[8192]{0}', space=vmem, size = 0x2000, scoped, tag = 'input window, operand 3, single buffered']
    #allocation10 [shape = 'u8[4096]{0}', space=vmem, size = 0x1000, scoped, tag = 'output window, operand 0, single buffered']
    %9 = vsyncpa [#allocation5], 0
    %10 = vsyncpa [#allocation3], 0
    %11 = vsyncpa [#allocation8], 0
    %12 = vsyncpa [#allocation4], 0
    // Predicated region
    $region2: #{tpu_custom_call.1} parent=1 // pred_check
      _
    $region3: #{tpu_custom_call.1} parent=1 // pred_check_branch
      %14 = sbr.rel (0) target = $region5
    $region4: #{tpu_custom_call.1} parent=1 // pred_region
      %s16 = ssub.s32 16, 16
      %17 = vsyncadd [#allocation5], %s16
      %20 = dma.hbm_to_smem %s0, 16, [#allocation2], [#allocation5]
    $region5: #{tpu_custom_call.1} parent=1 // pred_fallthru
      _
    // Predicated region
    $region6: #{tpu_custom_call.1} parent=1 // pred_check
      _
    $region7: #{tpu_custom_call.1} parent=1 // pred_check_branch
      %22 = sbr.rel (0) target = $region9
    $region8: #{tpu_custom_call.1} parent=1 // pred_region
      %s23 = sadd.s32 0, 0
      %p24 = scmp.lt.s32.totalorder %s23, 0
      %s25 = scalar_select %p24, %s23, 0
      %s26 = smul.u32 2, %s25
      %s28 = ssub.s32 256, 256
      %29 = vsyncadd [#allocation3], %s28
      %s30 = smul.addr %s26, 128
      %s31 = scalar_lea.hbm %s1, %s30
      %s32 = sshll.u32 [#allocation6], 4
      %s33 = int_to_ptr.vmem [resolvable:$true] %s32
      %38 = dma.hbm_to_vmem [thread:$0]  %s31, 256, %s33, [#allocation3], 128, 128, 8
    $region9: #{tpu_custom_call.1} parent=1 // pred_fallthru
      _
    // Predicated region
    $region10: #{tpu_custom_call.1} parent=1 // pred_check
      _
    $region11: #{tpu_custom_call.1} parent=1 // pred_check_branch
      %40 = sbr.rel (0) target = $region13
    $region12: #{tpu_custom_call.1} parent=1 // pred_region
      %s41 = sadd.s32 0, 0
      %p42 = scmp.lt.s32.totalorder %s41, 0
      %s43 = scalar_select %p42, %s41, 0
      %s44 = smul.u32 2, %s43
      %s46 = ssub.s32 256, 256
      %47 = vsyncadd [#allocation8], %s46
      %s48 = smul.addr %s44, 128
      %s49 = scalar_lea.hbm %s2, %s48
      %s50 = sshll.u32 [#allocation7], 4
      %s51 = int_to_ptr.vmem [resolvable:$true] %s50
      %56 = dma.hbm_to_vmem [thread:$0]  %s49, 256, %s51, [#allocation8], 128, 128, 8
    $region13: #{tpu_custom_call.1} parent=1 // pred_fallthru
      _
    // Predicated region
    $region14: #{tpu_custom_call.1} parent=1 // pred_check
      _
    $region15: #{tpu_custom_call.1} parent=1 // pred_check_branch
      %58 = sbr.rel (0) target = $region17
    $region16: #{tpu_custom_call.1} parent=1 // pred_region
      %s59 = sadd.s32 0, 0
      %p60 = scmp.lt.s32.totalorder %s59, 0
      %s61 = scalar_select %p60, %s59, 0
      %s62 = smul.u32 2, %s61
      %s64 = ssub.s32 256, 256
      %65 = vsyncadd [#allocation8], %s64
      %s66 = smul.addr %s62, 128
      %s67 = scalar_lea.hbm %s3, %s66
      %s68 = sshll.u32 [#allocation9], 4
      %s69 = int_to_ptr.vmem [resolvable:$true] %s68
      %74 = dma.hbm_to_vmem [thread:$0]  %s67, 256, %s69, [#allocation8], 128, 128, 8
    $region17: #{tpu_custom_call.1} parent=1 // pred_fallthru
      _
    // Predicated region
    $region18: #{tpu_custom_call.1} parent=1 // pred_check
      _
    $region19: #{tpu_custom_call.1} parent=1 // pred_check_branch
      %76 = sbr.rel (0) target = $region21
    $region20: #{tpu_custom_call.1} parent=1 // pred_region
      %77 = dma.done [#allocation5], 16
    $region21: #{tpu_custom_call.1} parent=1 // pred_fallthru
      _
    // Predicated region
    $region22: #{tpu_custom_call.1} parent=1 // pred_check
      _
    $region23: #{tpu_custom_call.1} parent=1 // pred_check_branch
      %79 = sbr.rel (0) target = $region25
    $region24: #{tpu_custom_call.1} parent=1 // pred_region
      %80 = dma.done [#allocation3], 256
    $region25: #{tpu_custom_call.1} parent=1 // pred_fallthru
      _
    // Predicated region
    $region26: #{tpu_custom_call.1} parent=1 // pred_check
      _
    $region27: #{tpu_custom_call.1} parent=1 // pred_check_branch
      %82 = sbr.rel (0) target = $region29
    $region28: #{tpu_custom_call.1} parent=1 // pred_region
      %83 = dma.done [#allocation8], 256
    $region29: #{tpu_custom_call.1} parent=1 // pred_fallthru
      _
    // Predicated region
    $region30: #{tpu_custom_call.1} parent=1 // pred_check
      _
    $region31: #{tpu_custom_call.1} parent=1 // pred_check_branch
      %85 = sbr.rel (0) target = $region33
    $region32: #{tpu_custom_call.1} parent=1 // pred_region
      %86 = dma.done [#allocation8], 256
    $region33: #{tpu_custom_call.1} parent=1 // pred_fallthru
      _
    %87 = sfence
    %s88 = sadd.s32 0, 0
    %p89 = scmp.lt.s32.totalorder %s88, 0
    %s90 = scalar_select %p89, %s88, 0
    %s91 = smul.u32 2, %s90
    %s92 = sadd.s32 0, 0
    %p93 = scmp.lt.s32.totalorder %s92, 0
    %s94 = scalar_select %p93, %s92, 0
    %s95 = smul.u32 2, %s94
    %s96 = sadd.s32 0, 0
    %p97 = scmp.lt.s32.totalorder %s96, 0
    %s98 = scalar_select %p97, %s96, 0
    %s99 = smul.u32 2, %s98
    %p100 = scmp.eq.s32.totalorder 0, 0
    // Predicated region
    $region34: #{tpu_custom_call.1} parent=1 // pred_check
      %p101 = pneg %p100
    $region35: #{tpu_custom_call.1} parent=1 // pred_check_branch
      %103 = sbr.rel (%p101) target = $region37
    $region36: #{tpu_custom_call.1} parent=1 // pred_region
      %104 = vst [vmem:[#allocation10] sm:$0xff] 0.0
    $region37: #{tpu_custom_call.1} parent=1 // pred_fallthru
      _
    %v105 = vld [vmem:[#allocation6] sm:$0xff]
    %v106 = vld [vmem:[#allocation6 + $0x8] sm:$0xff]
    %v107 = vld [vmem:[#allocation7] sm:$0xff]
    %v108 = vld [vmem:[#allocation7 + $0x8] sm:$0xff]
    %v109 = vmax.f32 %v105, 0.0
    %v110 = vmax.f32 %v106, 0.0
    %v111 = vmul.f32 %v105, %v107
    %v112 = vmul.f32 %v106, %v108
    %v113 = vsub.f32 %v109, %v111
    %v114 = vsub.f32 %v110, %v112
    %v115 = vand.u32 2147483647, %v105
    %v116 = vand.u32 2147483647, %v106
    %v117 = vsub.f32 0.0, %v115
    %v118 = vsub.f32 0.0, %v116
    %v119 = vmul.f32 %v117, 1.442695
    %v120 = vpow.pop %v119
    %v121 = vmul.f32 %v118, 1.442695
    %v122 = vpow.pop %v121
    %v123 = vadd.f32 %v120, 1.0
    %v124 = vlog2.pop %v123
    %v125 = vmul.f32 %v124, 0.6931472
    %v126 = vmul.f32 -0.5, %v120
    %v127 = vadd.f32 %v126, 1.0
    %v128 = vmul.f32 %v127, %v120
    %v129 = vand.u32 2147483647, %v120
    %vm130 = vcmp.lt.f32.partialorder %v129, 0.0004427343
    %v131 = vsel %vm130, %v128, %v125
    %v132 = vadd.f32 %v122, 1.0
    %v133 = vlog2.pop %v132
    %v134 = vmul.f32 %v133, 0.6931472
    %v135 = vmul.f32 -0.5, %v122
    %v136 = vadd.f32 %v135, 1.0
    %v137 = vmul.f32 %v136, %v122
    %v138 = vand.u32 2147483647, %v122
    %vm139 = vcmp.lt.f32.partialorder %v138, 0.0004427343
    %v140 = vsel %vm139, %v137, %v134
    %v141 = vadd.f32 %v113, %v131
    %v142 = vadd.f32 %v114, %v140
    %s143 = sld [smem:[#allocation2]]
    %s144 = sld [smem:[#allocation2 + $0x1]]
    %v145 = vld [vmem:[#allocation9] sm:$0xff]
    %v146 = vld [vmem:[#allocation9 + $0x8] sm:$0xff]
    %v147 = vstv %s144
    %v148 = vmul.f32 %v147, %v145
    %v149 = vmul.f32 %v147, %v146
    %v150 = vstv %s143
    %v151 = vadd.f32 %v150, %v148
    %v152 = vadd.f32 %v150, %v149
    %v153 = vmul.f32 %v141, %v151
    %v154 = vmul.f32 %v142, %v152
    %s155 = sadd.s32 0, 0
    %p156 = scmp.lt.s32.totalorder %s155, 1
    // Predicated region
    $region38: #{tpu_custom_call.1} parent=1 // pred_check
      %p157 = pneg %p156
    $region39: #{tpu_custom_call.1} parent=1 // pred_check_branch
      %159 = sbr.rel (%p157) target = $region41
    $region40: #{tpu_custom_call.1} parent=1 // pred_region
      %v160 = vld [vmem:[#allocation10] sm:$0xff]
      %v161 = vadd.f32 %v153, %v154
      %v162 = vadd.f32 %v160, %v161
      %163 = vst [vmem:[#allocation10] sm:$0xff] %v162
    $region41: #{tpu_custom_call.1} parent=1 // pred_fallthru
      _
    %p164 = scmp.ge.s32.totalorder %s155, 1
    // Predicated region
    $region42: #{tpu_custom_call.1} parent=1 // pred_check
      %p165 = pneg %p164
    $region43: #{tpu_custom_call.1} parent=1 // pred_check_branch
      %167 = sbr.rel (%p165) target = $region45
    $region44: #{tpu_custom_call.1} parent=1 // pred_region
      %s168 = smul.u32 %s155, 16
      %v169 = vlaneseq
      %v170 = vshrl.u32 %v169, 7
      %v171 = vadd.s32 %v170, 8
      %v172 = vstv %s168
      %v173 = vadd.s32 %v172, %v170
      %v174 = vadd.s32 %v172, %v171
      %vm175 = vcmp.lt.s32.totalorder %v173, 16
      %vm176 = vcmp.lt.s32.totalorder %v174, 16
      %v177 = vsel %vm175, %v153, 0.0
      %v178 = vsel %vm176, %v154, 0.0
      %v179 = vld [vmem:[#allocation10] sm:$0xff]
      %v180 = vadd.f32 %v177, %v178
      %v181 = vadd.f32 %v179, %v180
      %182 = vst [vmem:[#allocation10] sm:$0xff] %v181
    $region45: #{tpu_custom_call.1} parent=1 // pred_fallthru
      _
    // Predicated region
    $region46: #{tpu_custom_call.1} parent=1 // pred_check
      _
    $region47: #{tpu_custom_call.1} parent=1 // pred_check_branch
      %184 = sbr.rel (0) target = $region49
    $region48: #{tpu_custom_call.1} parent=1 // pred_region
      %s186 = ssub.s32 128, 128
      %187 = vsyncadd [#allocation4], %s186
      %s189 = sshll.u32 [#allocation10], 4
      %s190 = int_to_ptr.vmem [resolvable:$true] %s189
      %192 = dma.vmem_to_hbm [thread:$0]  %s190, 128, %s4, [#allocation4]
    $region49: #{tpu_custom_call.1} parent=1 // pred_fallthru
      _
    // Predicated region
    $region50: #{tpu_custom_call.1} parent=1 // pred_check
      _
    $region51: #{tpu_custom_call.1} parent=1 // pred_check_branch
      %194 = sbr.rel (0) target = $region53
    $region52: #{tpu_custom_call.1} parent=1 // pred_region
      %195 = dma.done [#allocation4], 128
    $region53: #{tpu_custom_call.1} parent=1 // pred_fallthru
      _
    %196 = vsyncpa [#allocation3], 1
    %197 = vsyncpa [#allocation8], 1
    %198 = vsyncpa [#allocation4], 1
    %199 = vsyncpa [#allocation5], 1

</llo_original>
